<compile_context>
chip_gen: v6e
topology: v6e:2x2x1
jax: 0.10.0
libtpu: 0.0.40
codegen_flags: <defaults>
</compile_context>

<pallas_src>
import functools

import jax
import jax.numpy as jnp
from jax.experimental import pallas as pl
from jax.experimental.pallas import tpu as pltpu


_VMEM_LIMIT = 32 * 1024 * 1024
_MAX_RESIDENT_ENTITIES = 1024     # table rows above this -> XLA row-gather path


def _round_up(x, m):
    return pl.cdiv(x, m) * m


def _score(u, v, *, alpha, beta):
    """u, v: (D, tn) f32, edge dim on lanes -> (1, tn) scores."""
    su = jnp.sum(u * u, axis=0, keepdims=True)       # ||u||^2
    sv = jnp.sum(v * v, axis=0, keepdims=True)       # ||v||^2
    uv = jnp.sum(u * v, axis=0, keepdims=True)       # u . v

    a0 = jnp.sqrt(su + beta)
    b0 = jnp.sqrt(sv + beta)
    inner = -a0 * b0 + uv                            # Lorentzian inner product
    dist = -2.0 * beta - 2.0 * inner                 # squared Lorentzian distance

    x = jnp.sqrt(su) - jnp.sqrt(sv)                  # ||u|| - ||v||
    softplus = jnp.maximum(x, 0.0) + jnp.log1p(jnp.exp(-jnp.abs(x)))
    return -dist - alpha * softplus                  # (1, tn), lane-dense


def _fused_gather_kernel(idx_ref, emb_ref, o_ref, *, alpha, beta):
    # idx_ref: (2, tn) int32 (row 0 = src, row 1 = dst)
    # emb_ref: (D, E_pad) f32, VMEM-resident across all grid steps.
    ids = idx_ref[...]
    emb = emb_ref[...]
    e_pad = emb.shape[1]
    tn = ids.shape[1]

    ent = jax.lax.broadcasted_iota(jnp.int32, (e_pad, tn), 0)
    oh_u = (ent == ids[0:1, :]).astype(jnp.float32)              # (E_pad, tn)
    oh_v = (ent == ids[1:2, :]).astype(jnp.float32)
    # One-hot gather on the (otherwise idle) MXU; exact row selection in f32.
    u = jnp.dot(emb, oh_u, preferred_element_type=jnp.float32)    # (D, tn)
    v = jnp.dot(emb, oh_v, preferred_element_type=jnp.float32)

    o_ref[...] = _score(u, v, alpha=alpha, beta=beta)


def _pregathered_kernel(u_ref, v_ref, o_ref, *, alpha, beta):
    # u_ref / v_ref: (tn, D) row-major gathered tiles; transpose on the idle
    # XLU into the lane-dense (D, tn) compute layout.
    u = jnp.transpose(u_ref[...])
    v = jnp.transpose(v_ref[...])
    o_ref[...] = _score(u, v, alpha=alpha, beta=beta)


def lorentzian_distance(embeddings, idxs, *, alpha=5.0, beta=1.0, block_n=8192):
    """embeddings: (num_entity, D) f32, idxs: (..., 2) int -> score (...,) f32."""
    embeddings = embeddings.astype(jnp.float32)
    lead_shape = idxs.shape[:-1]
    flat_idxs = idxs.reshape(-1, 2).astype(jnp.int32)
    n_edges = flat_idxs.shape[0]
    num_entity, d = embeddings.shape

    if n_edges == 0:                                  # explicit empty guard
        return jnp.zeros(lead_shape, jnp.float32)

    alpha = float(alpha)
    beta = float(beta)
    fuse_gather = num_entity <= _MAX_RESIDENT_ENTITIES
    e_pad = _round_up(num_entity, 128)
    lane_d = _round_up(d, 128)                        # lane padding of D in VMEM

    # ---- pick block_n (multiple of 128) -------------------------------------
    n_min = _round_up(n_edges, 128)
    block_n = _round_up(max(128, int(block_n)), 128)
    # Keep >= 2 grid steps when the edge count allows it (v7x: 2 TensorCores).
    block_n = min(block_n, max(128, (n_min // 256) * 128))
    if fuse_gather:
        # Each (E_pad, block_n) one-hot intermediate <= ~4 MiB.
        block_n = min(block_n,
                      max(128, ((4 * 1024 * 1024) // (4 * e_pad)) // 128 * 128))
    else:
        # 2 inputs x 2 buffers x block_n x lane-padded D x 4 B <= ~16 MiB.
        block_n = min(block_n,
                      max(128, ((16 * 1024 * 1024) // (16 * lane_d)) // 128 * 128))
    n_pad = _round_up(n_edges, block_n)
    grid = (n_pad // block_n,)

    # Pad the cheap int32 indices (index 0 is a valid row; padded scores are
    # finite and sliced off afterwards).
    src = flat_idxs[:, 0]
    dst = flat_idxs[:, 1]
    if n_pad != n_edges:
        pad = n_pad - n_edges
        src = jnp.pad(src, (0, pad))
        dst = jnp.pad(dst, (0, pad))

    compiler_params = pltpu.CompilerParams(
        dimension_semantics=("parallel",),
        vmem_limit_bytes=_VMEM_LIMIT,
    )
    out_shape = jax.ShapeDtypeStruct((1, n_pad), jnp.float32)
    out_spec = pl.BlockSpec((1, block_n), lambda i: (0, i))

    if fuse_gather:
        # One-time tiny transpose + pad of the table; it stays VMEM-resident.
        emb_t = embeddings.T                                     # (D, E)
        if e_pad != num_entity:
            emb_t = jnp.pad(emb_t, ((0, 0), (0, e_pad - num_entity)))
        idx2 = jnp.stack([src, dst], axis=0)                     # (2, n_pad)

        kernel = functools.partial(_fused_gather_kernel, alpha=alpha, beta=beta)
        out = pl.pallas_call(
            kernel,
            out_shape=out_shape,
            grid_spec=pltpu.PrefetchScalarGridSpec(
                num_scalar_prefetch=0,
                grid=grid,
                in_specs=[
                    pl.BlockSpec((2, block_n), lambda i: (0, i)),   # edge ids
                    pl.BlockSpec((d, e_pad), lambda i: (0, 0)),     # resident table
                ],
                out_specs=out_spec,
            ),
            compiler_params=compiler_params,
        )(idx2, emb_t)
    else:
        # Large table: contiguous XLA row gather; lane-dense transpose in-kernel.
        u_rows = jnp.take(embeddings, src, axis=0)               # (n_pad, D)
        v_rows = jnp.take(embeddings, dst, axis=0)

        kernel = functools.partial(_pregathered_kernel, alpha=alpha, beta=beta)
        out = pl.pallas_call(
            kernel,
            out_shape=out_shape,
            grid_spec=pltpu.PrefetchScalarGridSpec(
                num_scalar_prefetch=0,
                grid=grid,
                in_specs=[
                    pl.BlockSpec((block_n, d), lambda i: (i, 0)),
                    pl.BlockSpec((block_n, d), lambda i: (i, 0)),
                ],
                out_specs=out_spec,
            ),
            compiler_params=compiler_params,
        )(u_rows, v_rows)

    return out[0, :n_edges].reshape(lead_shape)


def _reference(embeddings, idxs, alpha=5.0, beta=1.0):
    e = embeddings[idxs]                                # (..., 2, D)
    su = jnp.sum(e**2, axis=-1)                         # (..., 2)
    a0 = jnp.sqrt(su + beta)
    uv = jnp.sum(e[..., 0, :] * e[..., 1, :], axis=-1)
    inner = -a0[..., 0] * a0[..., 1] + uv
    dist = -2.0 * beta - 2.0 * inner
    norms = jnp.sqrt(su)
    return -dist - alpha * jax.nn.softplus(norms[..., 0] - norms[..., 1])


if __name__ == "__main__":
    alpha, beta = 5.0, 1.0
    key = jax.random.PRNGKey(0)
    k_emb, k_idx, k_idx2, k_emb_big, k_idx3 = jax.random.split(key, 5)

    # --- small demo matching the torch module: 50 entities, dim 32 ----------
    num_entity, dim = 50, 32
    embeddings = jax.random.normal(k_emb, (num_entity, dim), dtype=jnp.float32)
    idxs = jax.random.randint(k_idx, (2, 8, 2), 0, num_entity, dtype=jnp.int32)

    score = jax.block_until_ready(
        lorentzian_distance(embeddings, idxs, alpha=alpha, beta=beta))
    ref = _reference(embeddings, idxs, alpha=alpha, beta=beta)
    assert score.shape == idxs.shape[:-1]
    assert jnp.allclose(score, ref, atol=1e-4, rtol=1e-4), (score, ref)

    # --- multi-block fused-gather path (padding + resident-table reuse) -----
    idxs2 = jax.random.randint(k_idx2, (700, 2), 0, num_entity, dtype=jnp.int32)
    score2 = jax.block_until_ready(
        lorentzian_distance(embeddings, idxs2, alpha=alpha, beta=beta))
    ref2 = _reference(embeddings, idxs2, alpha=alpha, beta=beta)
    assert jnp.allclose(score2, ref2, atol=1e-4, rtol=1e-4)

    # --- large-table fallback path (XLA row gather + in-kernel transpose) ---
    big_entities = 2048
    emb_big = jax.random.normal(k_emb_big, (big_entities, dim), dtype=jnp.float32)
    idxs3 = jax.random.randint(k_idx3, (300, 2), 0, big_entities, dtype=jnp.int32)
    score3 = jax.block_until_ready(
        lorentzian_distance(emb_big, idxs3, alpha=alpha, beta=beta))
    ref3 = _reference(emb_big, idxs3, alpha=alpha, beta=beta)
    assert jnp.allclose(score3, ref3, atol=1e-4, rtol=1e-4)

    print("KERNEL_OK")
</pallas_src>

<mosaic_0001>
module attributes {stable_mosaic.version = 11 : i64} {
  func.func @_fused_gather_kernel(%arg0: i32, %arg1: memref<2x128xi32, #tpu.memory_space<vmem>>, %arg2: memref<32x128xf32, #tpu.memory_space<vmem>>, %arg3: memref<1x128xf32, #tpu.memory_space<vmem>>) attributes {dimension_semantics = [#tpu.dimension_semantics<parallel>], iteration_bounds = array<i64: 1>, scalar_prefetch = 0 : i64, scratch_operands = 0 : i64, tpu.core_type = #tpu.core_type<tc>, window_params = [{transform_indices = @transform_0, window_bounds = array<i64: 2, 128>}, {pipeline_mode = #tpu.pipeline_mode<synchronous>, transform_indices = @transform_1, window_bounds = array<i64: 32, 128>}, {transform_indices = @transform_2, window_bounds = array<i64: 1, 128>}]} {
    %c0 = arith.constant 0 : index
    %c0_0 = arith.constant 0 : index
    %0 = vector.load %arg1[%c0, %c0_0] : memref<2x128xi32, #tpu.memory_space<vmem>>, vector<2x128xi32>
    %c0_1 = arith.constant 0 : index
    %c0_2 = arith.constant 0 : index
    %1 = vector.load %arg2[%c0_1, %c0_2] : memref<32x128xf32, #tpu.memory_space<vmem>>, vector<32x128xf32>
    %2 = tpu.iota {dimensions = array<i32: 0>} : vector<128x128xi32>
    %3 = vector.extract_strided_slice %0 {offsets = [0, 0], sizes = [1, 128], strides = [1, 1]} : vector<2x128xi32> to vector<1x128xi32>
    %4 = vector.broadcast %3 : vector<1x128xi32> to vector<128x128xi32>
    %5 = arith.cmpi eq, %2, %4 : vector<128x128xi32>
    %6 = arith.extui %5 : vector<128x128xi1> to vector<128x128xi32>
    %7 = arith.sitofp %6 : vector<128x128xi32> to vector<128x128xf32>
    %8 = vector.extract_strided_slice %0 {offsets = [1, 0], sizes = [1, 128], strides = [1, 1]} : vector<2x128xi32> to vector<1x128xi32>
    %9 = vector.broadcast %8 : vector<1x128xi32> to vector<128x128xi32>
    %10 = arith.cmpi eq, %2, %9 : vector<128x128xi32>
    %11 = arith.extui %10 : vector<128x128xi1> to vector<128x128xi32>
    %12 = arith.sitofp %11 : vector<128x128xi32> to vector<128x128xf32>
    %cst = arith.constant dense<0.000000e+00> : vector<32x128xf32>
    %13 = tpu.matmul %1, %7, %cst {dimension_numbers = #tpu.dot_dimension_numbers<[1], [0], [0], [1], [0, 0, 1, 1], [], []>} : vector<32x128xf32>, vector<128x128xf32>, vector<32x128xf32> -> vector<32x128xf32>
    %cst_3 = arith.constant dense<0.000000e+00> : vector<32x128xf32>
    %14 = tpu.matmul %1, %12, %cst_3 {dimension_numbers = #tpu.dot_dimension_numbers<[1], [0], [0], [1], [0, 0, 1, 1], [], []>} : vector<32x128xf32>, vector<128x128xf32>, vector<32x128xf32> -> vector<32x128xf32>
    %15 = arith.mulf %13, %13 : vector<32x128xf32>
    %cst_4 = arith.constant dense<0.000000e+00> : vector<128xf32>
    %16 = vector.multi_reduction <add>, %15, %cst_4 [0] : vector<32x128xf32> to vector<128xf32>
    %17 = vector.shape_cast %16 : vector<128xf32> to vector<1x128xf32>
    %18 = arith.mulf %14, %14 : vector<32x128xf32>
    %cst_5 = arith.constant dense<0.000000e+00> : vector<128xf32>
    %19 = vector.multi_reduction <add>, %18, %cst_5 [0] : vector<32x128xf32> to vector<128xf32>
    %20 = vector.shape_cast %19 : vector<128xf32> to vector<1x128xf32>
    %21 = arith.mulf %13, %14 : vector<32x128xf32>
    %cst_6 = arith.constant dense<0.000000e+00> : vector<128xf32>
    %22 = vector.multi_reduction <add>, %21, %cst_6 [0] : vector<32x128xf32> to vector<128xf32>
    %23 = vector.shape_cast %22 : vector<128xf32> to vector<1x128xf32>
    %cst_7 = arith.constant 1.000000e+00 : f32
    %24 = vector.broadcast %cst_7 : f32 to vector<1x128xf32>
    %25 = arith.addf %17, %24 : vector<1x128xf32>
    %26 = math.sqrt %25 : vector<1x128xf32>
    %cst_8 = arith.constant 1.000000e+00 : f32
    %27 = vector.broadcast %cst_8 : f32 to vector<1x128xf32>
    %28 = arith.addf %20, %27 : vector<1x128xf32>
    %29 = math.sqrt %28 : vector<1x128xf32>
    %cst_9 = arith.constant 0.000000e+00 : f32
    %30 = vector.broadcast %cst_9 : f32 to vector<1x128xf32>
    %31 = arith.subf %30, %26 : vector<1x128xf32>
    %32 = arith.mulf %31, %29 : vector<1x128xf32>
    %33 = arith.addf %32, %23 : vector<1x128xf32>
    %cst_10 = arith.constant 2.000000e+00 : f32
    %34 = vector.broadcast %cst_10 : f32 to vector<1x128xf32>
    %35 = arith.mulf %34, %33 : vector<1x128xf32>
    %cst_11 = arith.constant -2.000000e+00 : f32
    %36 = vector.broadcast %cst_11 : f32 to vector<1x128xf32>
    %37 = arith.subf %36, %35 : vector<1x128xf32>
    %38 = math.sqrt %17 : vector<1x128xf32>
    %39 = math.sqrt %20 : vector<1x128xf32>
    %40 = arith.subf %38, %39 : vector<1x128xf32>
    %cst_12 = arith.constant 0.000000e+00 : f32
    %41 = vector.broadcast %cst_12 : f32 to vector<1x128xf32>
    %42 = arith.maximumf %40, %41 : vector<1x128xf32>
    %43 = math.absf %40 : vector<1x128xf32>
    %cst_13 = arith.constant 0.000000e+00 : f32
    %44 = vector.broadcast %cst_13 : f32 to vector<1x128xf32>
    %45 = arith.subf %44, %43 : vector<1x128xf32>
    %46 = math.exp %45 : vector<1x128xf32>
    %47 = math.log1p %46 : vector<1x128xf32>
    %48 = arith.addf %42, %47 : vector<1x128xf32>
    %cst_14 = arith.constant 0.000000e+00 : f32
    %49 = vector.broadcast %cst_14 : f32 to vector<1x128xf32>
    %50 = arith.subf %49, %37 : vector<1x128xf32>
    %cst_15 = arith.constant 5.000000e+00 : f32
    %51 = vector.broadcast %cst_15 : f32 to vector<1x128xf32>
    %52 = arith.mulf %51, %48 : vector<1x128xf32>
    %53 = arith.subf %50, %52 : vector<1x128xf32>
    %c0_16 = arith.constant 0 : index
    %c0_17 = arith.constant 0 : index
    %54 = vector.load %arg3[%c0_16, %c0_17] : memref<1x128xf32, #tpu.memory_space<vmem>>, vector<1x128xf32>
    tpu.vector_store %arg3[%c0_16, %c0_17], %53 {strides = array<i32>} : memref<1x128xf32, #tpu.memory_space<vmem>>, vector<1x128xf32>,
    return
  }
  func.func @transform_0(%arg0: i32) -> (i32, i32) {
    %c0_i32 = arith.constant 0 : i32
    %c0_i32_0 = arith.constant 0 : i32
    return %c0_i32, %arg0 : i32, i32
  }
  func.func @transform_1(%arg0: i32) -> (i32, i32) {
    %c0_i32 = arith.constant 0 : i32
    %c0_i32_0 = arith.constant 0 : i32
    %c0_i32_1 = arith.constant 0 : i32
    return %c0_i32, %c0_i32_0 : i32, i32
  }
  func.func @transform_2(%arg0: i32) -> (i32, i32) {
    %c0_i32 = arith.constant 0 : i32
    %c0_i32_0 = arith.constant 0 : i32
    return %c0_i32, %arg0 : i32, i32
  }
}

</mosaic_0001>

<llo_original>
// kernel: tpu_custom_call.1
$region0: #{tpu_custom_call.1}
  #allocation0 [shape = 'u32[]', space=smem, size = 0x4, offset = 0x4, fixed_abs, tag = 'smem constant byte address 0x4 - core index']
  #allocation1 [shape = 'u32[144,128]{1,0:T(1,128)}', space=vmem, size = 0x12000, scoped, tag = 'internal scratch']
  %s0 = inlined_call_operand.hbm [shape: s32[2,128], index: 0, kind: input, shape index: {}]
  %s1 = inlined_call_operand.hbm [shape: f32[32,128], index: 1, kind: input, shape index: {}]
  %s2 = inlined_call_operand.hbm [shape: f32[1,128], index: 2, kind: output, shape index: {}]
  %s3 = sld [smem:[#allocation0]]
  $region26: #{tpu_custom_call.1} parent=0
    _
  %s5 = ssub.s32 1, %s3
  %s6 = scalar_select 0, %s5, %s3
  $region1: #{tpu_custom_call.1} parent=0
    #allocation2 [shape = 'u8[1024]{0}', space=vmem, size = 0x400, scoped, tag = 'input window, operand 0, single buffered']
    #allocation3 [shape = 's32[1]{0}', space=sflag, size = 0x4, scoped, tag = 'scoped memory for tpu_custom_call.1']
    #allocation4 [shape = 's32[1]{0}', space=sflag, size = 0x4, scoped, tag = 'scoped memory for tpu_custom_call.1']
    #allocation5 [shape = 'u8[16384]{0}', space=vmem, size = 0x4000, scoped, tag = 'input window, operand 1, single buffered']
    #allocation6 [shape = 's32[1]{0}', space=sflag, size = 0x4, scoped, tag = 'scoped memory for tpu_custom_call.1']
    #allocation7 [shape = 'u8[512]{0}', space=vmem, size = 0x400, scoped, tag = 'output window, operand 0, single buffered']
    %7 = vsyncpa [#allocation3], 0
    %8 = vsyncpa [#allocation6], 0
    %9 = vsyncpa [#allocation4], 0
    // Predicated region
    $region2: #{tpu_custom_call.1} parent=1 // pred_check
      _
    $region3: #{tpu_custom_call.1} parent=1 // pred_check_branch
      %11 = sbr.rel (0) target = $region5
    $region4: #{tpu_custom_call.1} parent=1 // pred_region
      %s13 = ssub.s32 32, 32
      %14 = vsyncadd [#allocation3], %s13
      %s16 = sshll.u32 [#allocation2], 4
      %s17 = int_to_ptr.vmem [resolvable:$true] %s16
      %19 = dma.hbm_to_vmem [thread:$0]  %s0, 32, %s17, [#allocation3]
    $region5: #{tpu_custom_call.1} parent=1 // pred_fallthru
      _
    // Predicated region
    $region6: #{tpu_custom_call.1} parent=1 // pred_check
      _
    $region7: #{tpu_custom_call.1} parent=1 // pred_check_branch
      %21 = sbr.rel (0) target = $region9
    $region8: #{tpu_custom_call.1} parent=1 // pred_region
      %s23 = ssub.s32 512, 512
      %24 = vsyncadd [#allocation6], %s23
      %s25 = sshll.u32 [#allocation5], 4
      %s26 = int_to_ptr.vmem [resolvable:$true] %s25
      %31 = dma.hbm_to_vmem [thread:$0]  %s1, 512, %s26, [#allocation6], 128, 128, 8
    $region9: #{tpu_custom_call.1} parent=1 // pred_fallthru
      _
    // Predicated region
    $region10: #{tpu_custom_call.1} parent=1 // pred_check
      _
    $region11: #{tpu_custom_call.1} parent=1 // pred_check_branch
      %33 = sbr.rel (0) target = $region13
    $region12: #{tpu_custom_call.1} parent=1 // pred_region
      %34 = dma.done [#allocation3], 32
    $region13: #{tpu_custom_call.1} parent=1 // pred_fallthru
      _
    // Predicated region
    $region14: #{tpu_custom_call.1} parent=1 // pred_check
      _
    $region15: #{tpu_custom_call.1} parent=1 // pred_check_branch
      %36 = sbr.rel (0) target = $region17
    $region16: #{tpu_custom_call.1} parent=1 // pred_region
      %37 = dma.done [#allocation6], 512
    $region17: #{tpu_custom_call.1} parent=1 // pred_fallthru
      _
    %v38 = vld [vmem:[#allocation2] sm:$0x3]
    %v39 = vld [vmem:[#allocation5] sm:$0xff]
    %v40 = vld [vmem:[#allocation5 + $0x8] sm:$0xff]
    %v41 = vld [vmem:[#allocation5 + $0x10] sm:$0xff]
    %v42 = vld [vmem:[#allocation5 + $0x18] sm:$0xff]
    %v43 = vlaneseq
    %v44 = vshrl.u32 %v43, 7
    %v45 = vadd.s32 %v44, 8
    %v46 = vadd.s32 %v44, 16
    %v47 = vadd.s32 %v44, 24
    %v48 = vadd.s32 %v44, 32
    %v49 = vadd.s32 %v44, 40
    %v50 = vadd.s32 %v44, 48
    %v51 = vadd.s32 %v44, 56
    %v52 = vadd.s32 %v44, 64
    %v53 = vadd.s32 %v44, 72
    %v54 = vadd.s32 %v44, 80
    %v55 = vadd.s32 %v44, 88
    %v56 = vadd.s32 %v44, 96
    %v57 = vadd.s32 %v44, 104
    %v58 = vadd.s32 %v44, 112
    %v59 = vadd.s32 %v44, 120
    %v60 = vlaneseq
    %v61 = vshrl.u32 %v60, 7
    %v62 = vsub.s32 0, %v61
    %v63 = vrot.slane %v38, %v62
    %vm64 = vcmp.eq.s32.totalorder %v44, %v63
    %vm65 = vcmp.eq.s32.totalorder %v45, %v63
    %vm66 = vcmp.eq.s32.totalorder %v46, %v63
    %vm67 = vcmp.eq.s32.totalorder %v47, %v63
    %vm68 = vcmp.eq.s32.totalorder %v48, %v63
    %vm69 = vcmp.eq.s32.totalorder %v49, %v63
    %vm70 = vcmp.eq.s32.totalorder %v50, %v63
    %vm71 = vcmp.eq.s32.totalorder %v51, %v63
    %vm72 = vcmp.eq.s32.totalorder %v52, %v63
    %vm73 = vcmp.eq.s32.totalorder %v53, %v63
    %vm74 = vcmp.eq.s32.totalorder %v54, %v63
    %vm75 = vcmp.eq.s32.totalorder %v55, %v63
    %vm76 = vcmp.eq.s32.totalorder %v56, %v63
    %vm77 = vcmp.eq.s32.totalorder %v57, %v63
    %vm78 = vcmp.eq.s32.totalorder %v58, %v63
    %vm79 = vcmp.eq.s32.totalorder %v59, %v63
    %v80 = vsel %vm64, 1, 0
    %v81 = vsel %vm65, 1, 0
    %v82 = vsel %vm66, 1, 0
    %v83 = vsel %vm67, 1, 0
    %v84 = vsel %vm68, 1, 0
    %v85 = vsel %vm69, 1, 0
    %v86 = vsel %vm70, 1, 0
    %v87 = vsel %vm71, 1, 0
    %v88 = vsel %vm72, 1, 0
    %v89 = vsel %vm73, 1, 0
    %v90 = vsel %vm74, 1, 0
    %v91 = vsel %vm75, 1, 0
    %v92 = vsel %vm76, 1, 0
    %v93 = vsel %vm77, 1, 0
    %v94 = vsel %vm78, 1, 0
    %v95 = vsel %vm79, 1, 0
    %v96 = vcvt.s32.f32 %v80
    %v97 = vcvt.s32.f32 %v81
    %v98 = vcvt.s32.f32 %v82
    %v99 = vcvt.s32.f32 %v83
    %v100 = vcvt.s32.f32 %v84
    %v101 = vcvt.s32.f32 %v85
    %v102 = vcvt.s32.f32 %v86
    %v103 = vcvt.s32.f32 %v87
    %v104 = vcvt.s32.f32 %v88
    %v105 = vcvt.s32.f32 %v89
    %v106 = vcvt.s32.f32 %v90
    %v107 = vcvt.s32.f32 %v91
    %v108 = vcvt.s32.f32 %v92
    %v109 = vcvt.s32.f32 %v93
    %v110 = vcvt.s32.f32 %v94
    %v111 = vcvt.s32.f32 %v95
    %v112 = vlaneseq
    %v113 = vshrl.u32 %v112, 7
    %v114 = vsub.s32 1, %v113
    %v115 = vrot.slane %v38, %v114
    %vm116 = vcmp.eq.s32.totalorder %v44, %v115
    %vm117 = vcmp.eq.s32.totalorder %v45, %v115
    %vm118 = vcmp.eq.s32.totalorder %v46, %v115
    %vm119 = vcmp.eq.s32.totalorder %v47, %v115
    %vm120 = vcmp.eq.s32.totalorder %v48, %v115
    %vm121 = vcmp.eq.s32.totalorder %v49, %v115
    %vm122 = vcmp.eq.s32.totalorder %v50, %v115
    %vm123 = vcmp.eq.s32.totalorder %v51, %v115
    %vm124 = vcmp.eq.s32.totalorder %v52, %v115
    %vm125 = vcmp.eq.s32.totalorder %v53, %v115
    %vm126 = vcmp.eq.s32.totalorder %v54, %v115
    %vm127 = vcmp.eq.s32.totalorder %v55, %v115
    %vm128 = vcmp.eq.s32.totalorder %v56, %v115
    %vm129 = vcmp.eq.s32.totalorder %v57, %v115
    %vm130 = vcmp.eq.s32.totalorder %v58, %v115
    %vm131 = vcmp.eq.s32.totalorder %v59, %v115
    %v132 = vsel %vm116, 1, 0
    %v133 = vsel %vm117, 1, 0
    %v134 = vsel %vm118, 1, 0
    %v135 = vsel %vm119, 1, 0
    %v136 = vsel %vm120, 1, 0
    %v137 = vsel %vm121, 1, 0
    %v138 = vsel %vm122, 1, 0
    %v139 = vsel %vm123, 1, 0
    %v140 = vsel %vm124, 1, 0
    %v141 = vsel %vm125, 1, 0
    %v142 = vsel %vm126, 1, 0
    %v143 = vsel %vm127, 1, 0
    %v144 = vsel %vm128, 1, 0
    %v145 = vsel %vm129, 1, 0
    %v146 = vsel %vm130, 1, 0
    %v147 = vsel %vm131, 1, 0
    %v148 = vcvt.s32.f32 %v132
    %v149 = vcvt.s32.f32 %v133
    %v150 = vcvt.s32.f32 %v134
    %v151 = vcvt.s32.f32 %v135
    %v152 = vcvt.s32.f32 %v136
    %v153 = vcvt.s32.f32 %v137
    %v154 = vcvt.s32.f32 %v138
    %v155 = vcvt.s32.f32 %v139
    %v156 = vcvt.s32.f32 %v140
    %v157 = vcvt.s32.f32 %v141
    %v158 = vcvt.s32.f32 %v142
    %v159 = vcvt.s32.f32 %v143
    %v160 = vcvt.s32.f32 %v144
    %v161 = vcvt.s32.f32 %v145
    %v162 = vcvt.s32.f32 %v146
    %v163 = vcvt.s32.f32 %v147
    %164 = vmatprep.subr.mxu0 0.0
    %165 = vmatpush1.msra.mxu0 %v111
    %166 = vmatprep.subr.mxu0 0.0
    %167 = vmatpush1.msra.mxu0 %v110
    %168 = vmatprep.subr.mxu0 0.0
    %169 = vmatpush1.msra.mxu0 %v109
    %170 = vmatprep.subr.mxu0 0.0
    %171 = vmatpush1.msra.mxu0 %v108
    %172 = vmatprep.subr.mxu0 0.0
    %173 = vmatpush1.msra.mxu0 %v107
    %174 = vmatprep.subr.mxu0 0.0
    %175 = vmatpush1.msra.mxu0 %v106
    %176 = vmatprep.subr.mxu0 0.0
    %177 = vmatpush1.msra.mxu0 %v105
    %178 = vmatprep.subr.mxu0 0.0
    %179 = vmatpush1.msra.mxu0 %v104
    %180 = vmatprep.subr.mxu0 0.0
    %181 = vmatpush1.msra.mxu0 %v103
    %182 = vmatprep.subr.mxu0 0.0
    %183 = vmatpush1.msra.mxu0 %v102
    %184 = vmatprep.subr.mxu0 0.0
    %185 = vmatpush1.msra.mxu0 %v101
    %186 = vmatprep.subr.mxu0 0.0
    %187 = vmatpush1.msra.mxu0 %v100
    %188 = vmatprep.subr.mxu0 0.0
    %189 = vmatpush1.msra.mxu0 %v99
    %190 = vmatprep.subr.mxu0 0.0
    %191 = vmatpush1.msra.mxu0 %v98
    %192 = vmatprep.subr.mxu0 0.0
    %193 = vmatpush1.msra.mxu0 %v97
    %194 = vmatprep.subr.mxu0 0.0
    %195 = vmatpush1.msra.mxu0 %v96
    %196 = vmatprep.subr.mxu0 0.0
    %197 = vmatpush2.msra.mxu0 0.0
    %198 = vmatprep.subr.mxu0 0.0
    %199 = vmatpush2.msra.mxu0 0.0
    %200 = vmatprep.subr.mxu0 0.0
    %201 = vmatpush2.msra.mxu0 0.0
    %202 = vmatprep.subr.mxu0 0.0
    %203 = vmatpush2.msra.mxu0 0.0
    %204 = vmatprep.subr.mxu0 0.0
    %205 = vmatpush2.msra.mxu0 0.0
    %206 = vmatprep.subr.mxu0 0.0
    %207 = vmatpush2.msra.mxu0 0.0
    %208 = vmatprep.subr.mxu0 0.0
    %209 = vmatpush2.msra.mxu0 0.0
    %210 = vmatprep.subr.mxu0 0.0
    %211 = vmatpush2.msra.mxu0 0.0
    %212 = vmatprep.subr.mxu0 0.0
    %213 = vmatpush2.msra.mxu0 0.0
    %214 = vmatprep.subr.mxu0 0.0
    %215 = vmatpush2.msra.mxu0 0.0
    %216 = vmatprep.subr.mxu0 0.0
    %217 = vmatpush2.msra.mxu0 0.0
    %218 = vmatprep.subr.mxu0 0.0
    %219 = vmatpush2.msra.mxu0 0.0
    %220 = vmatprep.subr.mxu0 0.0
    %221 = vmatpush2.msra.mxu0 0.0
    %222 = vmatprep.subr.mxu0 0.0
    %223 = vmatpush2.msra.mxu0 0.0
    %224 = vmatprep.subr.mxu0 0.0
    %225 = vmatpush2.msra.mxu0 0.0
    %226 = vmatprep.subr.mxu0 0.0
    %227 = vmatpush2.msra.mxu0 0.0
    %228 = vmatprep.mubr.f32.mxu0 0.0
    %229 = vmatmul.mubr.f32.gmra.mxu0 %v39
    %v230 = vpop.f32.mrf.mxu0
    %v231 = vadd.f32 0.0, %v230
    %v232 = vpop.f32.mrf.mxu0
    %233 = vmatprep.mubr.f32.mxu0 0.0
    %234 = vmatmul.mubr.f32.gmra.mxu0 %v40
    %v235 = vpop.f32.mrf.mxu0
    %v236 = vadd.f32 0.0, %v235
    %v237 = vpop.f32.mrf.mxu0
    %238 = vmatprep.mubr.f32.mxu0 0.0
    %239 = vmatmul.mubr.f32.gmra.mxu0 %v41
    %v240 = vpop.f32.mrf.mxu0
    %v241 = vadd.f32 0.0, %v240
    %v242 = vpop.f32.mrf.mxu0
    %243 = vmatprep.mubr.f32.mxu0 0.0
    %244 = vmatmul.mubr.f32.gmra.mxu0 %v42
    %v245 = vpop.f32.mrf.mxu0
    %v246 = vadd.f32 0.0, %v245
    %v247 = vpop.f32.mrf.mxu0
    %248 = vdwg.mxu0
    %249 = vmatprep.subr.mxu0 0.0
    %250 = vmatpush1.msra.mxu0 %v163
    %251 = vmatprep.subr.mxu0 0.0
    %252 = vmatpush1.msra.mxu0 %v162
    %253 = vmatprep.subr.mxu0 0.0
    %254 = vmatpush1.msra.mxu0 %v161
    %255 = vmatprep.subr.mxu0 0.0
    %256 = vmatpush1.msra.mxu0 %v160
    %257 = vmatprep.subr.mxu0 0.0
    %258 = vmatpush1.msra.mxu0 %v159
    %259 = vmatprep.subr.mxu0 0.0
    %260 = vmatpush1.msra.mxu0 %v158
    %261 = vmatprep.subr.mxu0 0.0
    %262 = vmatpush1.msra.mxu0 %v157
    %263 = vmatprep.subr.mxu0 0.0
    %264 = vmatpush1.msra.mxu0 %v156
    %265 = vmatprep.subr.mxu0 0.0
    %266 = vmatpush1.msra.mxu0 %v155
    %267 = vmatprep.subr.mxu0 0.0
    %268 = vmatpush1.msra.mxu0 %v154
    %269 = vmatprep.subr.mxu0 0.0
    %270 = vmatpush1.msra.mxu0 %v153
    %271 = vmatprep.subr.mxu0 0.0
    %272 = vmatpush1.msra.mxu0 %v152
    %273 = vmatprep.subr.mxu0 0.0
    %274 = vmatpush1.msra.mxu0 %v151
    %275 = vmatprep.subr.mxu0 0.0
    %276 = vmatpush1.msra.mxu0 %v150
    %277 = vmatprep.subr.mxu0 0.0
    %278 = vmatpush1.msra.mxu0 %v149
    %279 = vmatprep.subr.mxu0 0.0
    %280 = vmatpush1.msra.mxu0 %v148
    %281 = vmatprep.subr.mxu0 0.0
    %282 = vmatpush2.msra.mxu0 0.0
    %283 = vmatprep.subr.mxu0 0.0
    %284 = vmatpush2.msra.mxu0 0.0
    %285 = vmatprep.subr.mxu0 0.0
    %286 = vmatpush2.msra.mxu0 0.0
    %287 = vmatprep.subr.mxu0 0.0
    %288 = vmatpush2.msra.mxu0 0.0
    %289 = vmatprep.subr.mxu0 0.0
    %290 = vmatpush2.msra.mxu0 0.0
    %291 = vmatprep.subr.mxu0 0.0
    %292 = vmatpush2.msra.mxu0 0.0
    %293 = vmatprep.subr.mxu0 0.0
    %294 = vmatpush2.msra.mxu0 0.0
    %295 = vmatprep.subr.mxu0 0.0
    %296 = vmatpush2.msra.mxu0 0.0
    %297 = vmatprep.subr.mxu0 0.0
    %298 = vmatpush2.msra.mxu0 0.0
    %299 = vmatprep.subr.mxu0 0.0
    %300 = vmatpush2.msra.mxu0 0.0
    %301 = vmatprep.subr.mxu0 0.0
    %302 = vmatpush2.msra.mxu0 0.0
    %303 = vmatprep.subr.mxu0 0.0
    %304 = vmatpush2.msra.mxu0 0.0
    %305 = vmatprep.subr.mxu0 0.0
    %306 = vmatpush2.msra.mxu0 0.0
    %307 = vmatprep.subr.mxu0 0.0
    %308 = vmatpush2.msra.mxu0 0.0
    %309 = vmatprep.subr.mxu0 0.0
    %310 = vmatpush2.msra.mxu0 0.0
    %311 = vmatprep.subr.mxu0 0.0
    %312 = vmatpush2.msra.mxu0 0.0
    %313 = vmatprep.mubr.f32.mxu0 0.0
    %314 = vmatmul.mubr.f32.gmra.mxu0 %v39
    %v315 = vpop.f32.mrf.mxu0
    %v316 = vadd.f32 0.0, %v315
    %v317 = vpop.f32.mrf.mxu0
    %318 = vmatprep.mubr.f32.mxu0 0.0
    %319 = vmatmul.mubr.f32.gmra.mxu0 %v40
    %v320 = vpop.f32.mrf.mxu0
    %v321 = vadd.f32 0.0, %v320
    %v322 = vpop.f32.mrf.mxu0
    %323 = vmatprep.mubr.f32.mxu0 0.0
    %324 = vmatmul.mubr.f32.gmra.mxu0 %v41
    %v325 = vpop.f32.mrf.mxu0
    %v326 = vadd.f32 0.0, %v325
    %v327 = vpop.f32.mrf.mxu0
    %328 = vmatprep.mubr.f32.mxu0 0.0
    %329 = vmatmul.mubr.f32.gmra.mxu0 %v42
    %v330 = vpop.f32.mrf.mxu0
    %v331 = vadd.f32 0.0, %v330
    %v332 = vpop.f32.mrf.mxu0
    %333 = vdwg.mxu0
    %v334 = vmul.f32 %v231, %v231
    %v335 = vmul.f32 %v236, %v236
    %v336 = vmul.f32 %v241, %v241
    %v337 = vmul.f32 %v246, %v246
    %v338 = vadd.f32 %v334, %v335
    %v339 = vadd.f32 %v338, %v336
    %v340 = vadd.f32 %v339, %v337
    %v341 = vrot.slane %v340, 4
    %v342 = vadd.f32 %v340, %v341
    %v343 = vrot.slane %v342, 2
    %v344 = vadd.f32 %v342, %v343
    %v345 = vrot.slane %v344, 1
    %v346 = vadd.f32 %v344, %v345
    %v347 = vmul.f32 %v316, %v316
    %v348 = vmul.f32 %v321, %v321
    %v349 = vmul.f32 %v326, %v326
    %v350 = vmul.f32 %v331, %v331
    %v351 = vadd.f32 %v347, %v348
    %v352 = vadd.f32 %v351, %v349
    %v353 = vadd.f32 %v352, %v350
    %v354 = vrot.slane %v353, 4
    %v355 = vadd.f32 %v353, %v354
    %v356 = vrot.slane %v355, 2
    %v357 = vadd.f32 %v355, %v356
    %v358 = vrot.slane %v357, 1
    %v359 = vadd.f32 %v357, %v358
    %v360 = vmul.f32 %v231, %v316
    %v361 = vmul.f32 %v236, %v321
    %v362 = vmul.f32 %v241, %v326
    %v363 = vmul.f32 %v246, %v331
    %v364 = vadd.f32 %v360, %v361
    %v365 = vadd.f32 %v364, %v362
    %v366 = vadd.f32 %v365, %v363
    %v367 = vrot.slane %v366, 4
    %v368 = vadd.f32 %v366, %v367
    %v369 = vrot.slane %v368, 2
    %v370 = vadd.f32 %v368, %v369
    %v371 = vrot.slane %v370, 1
    %v372 = vadd.f32 %v370, %v371
    %v373 = vadd.f32 %v346, 1.0
    %v374 = vrsqrt.pop %v373
    %v375 = vmul.f32 %v373, %v374
    %vm376 = vcmp.eq.f32.partialorder %v373, inf
    %v377 = vsel %vm376, %v373, %v375
    %vm378 = vcmp.eq.f32.partialorder %v373, 0.0
    %v379 = vand.u32 %v373, 2147483648
    %v380 = vsel %vm378, %v379, %v377
    %v381 = vadd.f32 %v359, 1.0
    %v382 = vrsqrt.pop %v381
    %v383 = vmul.f32 %v381, %v382
    %vm384 = vcmp.eq.f32.partialorder %v381, inf
    %v385 = vsel %vm384, %v381, %v383
    %vm386 = vcmp.eq.f32.partialorder %v381, 0.0
    %v387 = vand.u32 %v381, 2147483648
    %v388 = vsel %vm386, %v387, %v385
    %v389 = vsub.f32 0.0, %v380
    %v390 = vmul.f32 %v389, %v388
    %v391 = vadd.f32 %v390, %v372
    %v392 = vmul.f32 %v391, 2.0
    %v393 = vsub.f32 -2.0, %v392
    %v394 = vrsqrt.pop %v346
    %v395 = vmul.f32 %v346, %v394
    %vm396 = vcmp.eq.f32.partialorder %v346, inf
    %v397 = vsel %vm396, %v346, %v395
    %vm398 = vcmp.eq.f32.partialorder %v346, 0.0
    %v399 = vand.u32 %v346, 2147483648
    %v400 = vsel %vm398, %v399, %v397
    %v401 = vrsqrt.pop %v359
    %v402 = vmul.f32 %v359, %v401
    %vm403 = vcmp.eq.f32.partialorder %v359, inf
    %v404 = vsel %vm403, %v359, %v402
    %vm405 = vcmp.eq.f32.partialorder %v359, 0.0
    %v406 = vand.u32 %v359, 2147483648
    %v407 = vsel %vm405, %v406, %v404
    %v408 = vsub.f32 %v400, %v407
    %v409 = vmax.f32 %v408, 0.0
    %v410 = vand.u32 2147483647, %v408
    %v411 = vsub.f32 0.0, %v410
    %v412 = vmul.f32 %v411, 1.442695
    %v413 = vpow.pop %v412
    %v414 = vadd.f32 %v413, 1.0
    %v415 = vlog2.pop %v414
    %v416 = vmul.f32 %v415, 0.6931472
    %v417 = vmul.f32 -0.5, %v413
    %v418 = vadd.f32 %v417, 1.0
    %v419 = vmul.f32 %v418, %v413
    %v420 = vand.u32 2147483647, %v413
    %vm421 = vcmp.lt.f32.partialorder %v420, 0.0004427343
    %v422 = vsel %vm421, %v419, %v416
    %v423 = vadd.f32 %v409, %v422
    %v424 = vsub.f32 0.0, %v393
    %v425 = vmul.f32 %v423, 5.0
    %v426 = vsub.f32 %v424, %v425
    %427 = vst [vmem:[#allocation7] sm:$0x1] %v426
    // Predicated region
    $region18: #{tpu_custom_call.1} parent=1 // pred_check
      _
    $region19: #{tpu_custom_call.1} parent=1 // pred_check_branch
      %429 = sbr.rel (0) target = $region21
    $region20: #{tpu_custom_call.1} parent=1 // pred_region
      %s431 = ssub.s32 16, 16
      %432 = vsyncadd [#allocation4], %s431
      %s434 = sshll.u32 [#allocation7], 4
      %s435 = int_to_ptr.vmem [resolvable:$true] %s434
      %437 = dma.vmem_to_hbm [thread:$0]  %s435, 16, %s2, [#allocation4]
    $region21: #{tpu_custom_call.1} parent=1 // pred_fallthru
      _
    // Predicated region
    $region22: #{tpu_custom_call.1} parent=1 // pred_check
      _
    $region23: #{tpu_custom_call.1} parent=1 // pred_check_branch
      %439 = sbr.rel (0) target = $region25
    $region24: #{tpu_custom_call.1} parent=1 // pred_region
      %440 = dma.done [#allocation4], 16
    $region25: #{tpu_custom_call.1} parent=1 // pred_fallthru
      _
    %441 = vsyncpa [#allocation3], 1
    %442 = vsyncpa [#allocation6], 1
    %443 = vsyncpa [#allocation4], 1

</llo_original>
